<compile_context>
chip_gen: v5e
topology: v5e:2x2
jax: 0.10.0
libtpu: 0.0.40
codegen_flags: <defaults>
</compile_context>

<pallas_src>
import math

import jax
import jax.numpy as jnp
from jax.experimental import pallas as pl
from jax.experimental.pallas import tpu as pltpu


def _num_chunks(n: int, max_chunks: int = 4) -> int:
    """Number of leading-dim chunks copied with independent, in-flight DMAs.

    Chunk boundaries are kept multiples of 8 rows (the sublane tile) so every
    DMA starts on a tile-aligned offset of the (N, F) HBM layout; if N cannot
    be split that way we just issue a single whole-array DMA.
    """
    k = max_chunks
    while k > 1:
        if n % (k * 8) == 0:
            return k
        k //= 2
    return 1


def _make_flatten_kernel(chunks):
    """Build a kernel that issues all chunk DMAs, then waits on all of them."""

    def kernel(x_ref, o_ref, sems):
        copies = []
        for idx, (start, size) in enumerate(chunks):
            cp = pltpu.make_async_copy(
                x_ref.at[pl.ds(start, size), :],
                o_ref.at[pl.ds(start, size), :],
                sems.at[idx],
            )
            cp.start()
            copies.append(cp)
        for cp in copies:
            cp.wait()

    return kernel


def flatten(x: jax.Array) -> jax.Array:
    """Pallas equivalent of Flatten.forward: (N, ...) -> (N, prod(...))."""
    n = x.shape[0]
    f = math.prod(x.shape[1:])

    # Row-major flatten == torch .view semantics for a contiguous input.
    x2 = x.reshape(n, f)

    if n == 0 or f == 0:
        # Nothing to copy; the reshape alone is the whole op.
        return x2

    k = _num_chunks(n)
    base = n // k
    chunks = tuple((i * base, base) for i in range(k))

    itemsize = jnp.dtype(x.dtype).itemsize

    return pl.pallas_call(
        _make_flatten_kernel(chunks),
        out_shape=jax.ShapeDtypeStruct((n, f), x.dtype),
        # Both operands stay in HBM; the kernel moves data with explicit DMAs,
        # so nothing is staged through VMEM and there is no grid overhead.
        in_specs=[pl.BlockSpec(memory_space=pl.ANY)],
        out_specs=pl.BlockSpec(memory_space=pl.ANY),
        scratch_shapes=[pltpu.SemaphoreType.DMA((k,))],
        cost_estimate=pl.CostEstimate(
            flops=0,
            transcendentals=0,
            bytes_accessed=2 * n * f * itemsize,
        ),
    )(x2)


if __name__ == "__main__":
    key = jax.random.PRNGKey(0)
    # Conv-style NCHW input: batch=2, channels=4, spatial=16x16.
    x = jax.random.normal(key, (2, 4, 16, 16), dtype=jnp.float32)

    out = flatten(x)
    jax.block_until_ready(out)

    # Correctness: torch .view == row-major reshape for a contiguous input.
    ref = x.reshape(x.shape[0], -1)
    assert out.shape == (2, 4 * 16 * 16), out.shape
    assert out.dtype == x.dtype
    assert jnp.array_equal(out, ref), "Pallas flatten mismatch vs reference reshape"

    print("KERNEL_OK")
</pallas_src>

<mosaic_0001>
module attributes {stable_mosaic.version = 11 : i64} {
  func.func @kernel(%arg0: memref<2x1024xf32, #tpu.memory_space<any>>, %arg1: memref<2x1024xf32, #tpu.memory_space<any>>, %arg2: memref<1x!tpu.dma_semaphore, #tpu.memory_space<semaphore_mem>>) attributes {dimension_semantics = [], scalar_prefetch = 0 : i64, scratch_operands = 1 : i64, tpu.core_type = #tpu.core_type<tc>} {
    %c0_i32 = arith.constant 0 : i32
    %c0_i32_0 = arith.constant 0 : i32
    %c0_i32_1 = arith.constant 0 : i32
    %0 = tpu.memref_slice %arg0[%c0_i32_0, %c0_i32_1] : memref<2x1024xf32, #tpu.memory_space<any>> -> memref<2x1024xf32, #tpu.memory_space<any>>
    %c0_i32_2 = arith.constant 0 : i32
    %c0_i32_3 = arith.constant 0 : i32
    %1 = tpu.memref_slice %arg1[%c0_i32_2, %c0_i32_3] : memref<2x1024xf32, #tpu.memory_space<any>> -> memref<2x1024xf32, #tpu.memory_space<any>>
    %2 = tpu.memref_slice %arg2[%c0_i32] : memref<1x!tpu.dma_semaphore, #tpu.memory_space<semaphore_mem>> -> memref<1x!tpu.dma_semaphore, #tpu.memory_space<semaphore_mem>>
    %3 = tpu.memref_squeeze %2 : memref<1x!tpu.dma_semaphore, #tpu.memory_space<semaphore_mem>> -> memref<!tpu.dma_semaphore, #tpu.memory_space<semaphore_mem>>
    tpu.enqueue_dma source(%0 : memref<2x1024xf32, #tpu.memory_space<any>>) target(%1 : memref<2x1024xf32, #tpu.memory_space<any>>) target_semaphore(%3 : memref<!tpu.dma_semaphore, #tpu.memory_space<semaphore_mem>>)
    %c0_i32_4 = arith.constant 0 : i32
    %c0_i32_5 = arith.constant 0 : i32
    %c0_i32_6 = arith.constant 0 : i32
    %4 = tpu.memref_slice %arg0[%c0_i32_5, %c0_i32_6] : memref<2x1024xf32, #tpu.memory_space<any>> -> memref<2x1024xf32, #tpu.memory_space<any>>
    %c0_i32_7 = arith.constant 0 : i32
    %c0_i32_8 = arith.constant 0 : i32
    %5 = tpu.memref_slice %arg1[%c0_i32_7, %c0_i32_8] : memref<2x1024xf32, #tpu.memory_space<any>> -> memref<2x1024xf32, #tpu.memory_space<any>>
    %6 = tpu.memref_slice %arg2[%c0_i32_4] : memref<1x!tpu.dma_semaphore, #tpu.memory_space<semaphore_mem>> -> memref<1x!tpu.dma_semaphore, #tpu.memory_space<semaphore_mem>>
    %7 = tpu.memref_squeeze %6 : memref<1x!tpu.dma_semaphore, #tpu.memory_space<semaphore_mem>> -> memref<!tpu.dma_semaphore, #tpu.memory_space<semaphore_mem>>
    tpu.wait_dma2 semaphore(%7 : memref<!tpu.dma_semaphore, #tpu.memory_space<semaphore_mem>>) src(%4 : memref<2x1024xf32, #tpu.memory_space<any>>) dst(%5 : memref<2x1024xf32, #tpu.memory_space<any>>)
    return
  }
}

</mosaic_0001>

<llo_original>
// kernel: tpu_custom_call.1
$region0: #{tpu_custom_call.1}
  #allocation0 [shape = 'u32[]', space=smem, size = 0x4, offset = 0x4, fixed_abs, tag = 'smem constant byte address 0x4 - core index']
  #allocation1 [shape = 'u32[72,128]{1,0:T(1,128)}', space=vmem, size = 0x9000, scoped, tag = 'internal scratch']
  #allocation2 [shape = 's32[1]{0}', space=sflag, size = 0x4, scoped, tag = 'scratch operand']
  #allocation3 [shape = 's32[]', space=sflag, size = 0x4, offset = 0, fixed_abs, tag = 'sflag constant byte address 0x0 - dummy sync flag']
  #allocation4 [shape = 'u32[0]{0}', space=smem, size = 0, offset = 0, fixed_abs, tag = 'smem constant byte address 0x0 - null']
  %s0 = inlined_call_operand.hbm [shape: f32[2,1024], index: 0, kind: input, shape index: {}]
  %s1 = inlined_call_operand.hbm [shape: f32[2,1024], index: 1, kind: output, shape index: {}]
  %s2 = sld [smem:[#allocation0]]
  $region2: #{tpu_custom_call.1} parent=0
    _
  %s4 = ssub.s32 1, %s2
  %s5 = scalar_select 0, %s4, %s2
  %s7 = sshll.u32 1, 14
  %s8 = sxor.u32 4294967295, %s7
  %s10 = sshll.u32 %s0, 4
  %s11 = int_to_ptr.hbm [resolvable:$true] %s10
  %s12 = sshll.u32 %s1, 4
  %s13 = int_to_ptr.hbm [resolvable:$true] %s12
  %16 = dma.general %s11, 256, %s13, [#allocation2], [#allocation3], [#allocation4], 0, 0
  %s17 = smul.u32 2, 1
  %s18 = smul.u32 %s17, 8
  %s19 = sshll.u32 %s18, 4
  %20 = dma.done [#allocation2], %s19
  %21 = vsyncmov [#allocation2]
  %s22 = vpop.sfrf %21
  %p23 = scmp.eq.s32.totalorder %s22, 0
  %p24 = pneg %p23
  %26 = shalt.err (%p24)

</llo_original>
